<compile_context>
chip_gen: v7x
topology: tpu7x:2x2x1
jax: 0.10.0
libtpu: 0.0.40
codegen_flags: <defaults>
</compile_context>

<pallas_src>
import functools

import jax
import jax.numpy as jnp
from jax.experimental import pallas as pl
from jax.experimental.pallas import tpu as pltpu

_LANE = 128
_COMPUTE_DTYPE = jnp.bfloat16      # MXU operand dtype (f32 accumulation)


def _round_up(v, m):
    return (v + m - 1) // m * m


@functools.lru_cache(maxsize=None)
def _vmem_plan():
    """Generation-aware (vmem_budget, vmem_limit, max_batch_tile_rows)."""
    try:
        cap = int(pltpu.get_tpu_info().vmem_capacity_bytes)
    except Exception:                       # no info -> assume smallest (v7x/TC)
        cap = 64 * 1024 * 1024
    if cap >= 100 * 1024 * 1024:            # v5e / v6e: 128 MiB physical VMEM
        return 96 * 1024 * 1024, 112 * 1024 * 1024, 2048
    return 40 * 1024 * 1024, 48 * 1024 * 1024, 512     # v7x: 64 MiB per TC


def _row_bytes_resident(in_dim, op, hp):
    # double-buffered f32 x tile + double-buffered out tile + f32 temporaries
    return 2 * in_dim * 4 + 2 * op * 4 + (3 * op + 2 * hp) * 4


def _row_bytes_ktiled(k_tile, op, hp):
    # double-buffered x K-tile + double-buffered out tile + f32 acc + temporaries
    return 2 * k_tile * 4 + 2 * op * 4 + op * 4 + (3 * op + 2 * hp) * 4


def _resident_gating_bytes(op, hp, wbytes):
    # 2x: conservative vs possible double-buffering of the resident operands.
    return 2 * ((op * hp + hp * op) * wbytes + (op + hp) * 4)


# --------------------------------------------------------------------------- #
# Kernels
# --------------------------------------------------------------------------- #
def _gating_and_store(act, wg1_ref, b2_ref, wg2_ref, out_ref):
    """gates = sigmoid(relu(act@wg1 + b2) @ wg2); out = act * gates."""
    g = jnp.dot(act.astype(wg1_ref.dtype), wg1_ref[...],
                preferred_element_type=jnp.float32)
    g = jnp.maximum(g + b2_ref[...], 0.0)
    g = jnp.dot(g.astype(wg2_ref.dtype), wg2_ref[...],
                preferred_element_type=jnp.float32)
    g = jax.nn.sigmoid(g)
    out_ref[...] = (act * g).astype(out_ref.dtype)


def _se_head_kernel_resident(x_ref, wh_ref, b1_ref, wg1_ref, b2_ref, wg2_ref,
                             out_ref):
    """All weights VMEM-resident; one batch tile per grid step."""
    x = x_ref[...].astype(wh_ref.dtype)      # in-kernel cast: no extra HBM pass
    act = jnp.dot(x, wh_ref[...], preferred_element_type=jnp.float32)
    act = act + b1_ref[...]
    _gating_and_store(act, wg1_ref, b2_ref, wg2_ref, out_ref)


def _se_head_kernel_ktiled(x_ref, wh_ref, b1_ref, wg1_ref, b2_ref, wg2_ref,
                           out_ref, acc_ref, *, in_dim, k_tile):
    """Hidden weight streamed over K tiles (v7x fallback); f32 accumulator."""
    k = pl.program_id(1)

    @pl.when(k == 0)
    def _init():
        acc_ref[...] = jnp.zeros_like(acc_ref)

    x = x_ref[...].astype(wh_ref.dtype)
    if in_dim % k_tile:
        # Ragged last K block: zero the out-of-range columns (wh is zero-padded
        # along K in prep, so the padded contribution is exactly zero).
        rem = in_dim - k * k_tile
        col = jax.lax.broadcasted_iota(jnp.int32, x.shape, 1)
        x = jnp.where(col < rem, x, jnp.zeros_like(x))
    acc_ref[...] += jnp.dot(x, wh_ref[...], preferred_element_type=jnp.float32)

    @pl.when(k == pl.num_programs(1) - 1)
    def _finish():
        act = acc_ref[...] + b1_ref[...]
        _gating_and_store(act, wg1_ref, b2_ref, wg2_ref, out_ref)


# --------------------------------------------------------------------------- #
# One-time weight preparation (model init)
# --------------------------------------------------------------------------- #
def se_head_prepare(hidden_w, gate_w1, gate_w2,
                    bn1_gamma, bn1_beta, bn1_mean, bn1_var,
                    bn2_gamma, bn2_beta, bn2_mean, bn2_var,
                    *, eps=1e-5, compute_dtype=_COMPUTE_DTYPE):
    """Fold eval-mode BN into the weights, cast to bf16 and lane-pad. Run once."""
    in_dim, out_dim = hidden_w.shape
    hid = gate_w1.shape[1]
    op = _round_up(out_dim, _LANE)
    hp = _round_up(hid, _LANE)

    # (x@W - mean)*gamma/sqrt(var+eps) + beta == x@(W*s) + (beta - mean*s)
    s1 = bn1_gamma / jnp.sqrt(bn1_var + eps)
    s2 = bn2_gamma / jnp.sqrt(bn2_var + eps)
    b1 = (bn1_beta - bn1_mean * s1).astype(jnp.float32)
    b2 = (bn2_beta - bn2_mean * s2).astype(jnp.float32)

    wh = (hidden_w * s1[None, :]).astype(compute_dtype)
    wg1 = (gate_w1 * s2[None, :]).astype(compute_dtype)
    wg2 = gate_w2.astype(compute_dtype)

    wh = jnp.pad(wh, ((0, 0), (0, op - out_dim)))
    wg1 = jnp.pad(wg1, ((0, op - out_dim), (0, hp - hid)))
    wg2 = jnp.pad(wg2, ((0, hp - hid), (0, op - out_dim)))
    b1 = jnp.pad(b1, (0, op - out_dim)).reshape(1, op)
    b2 = jnp.pad(b2, (0, hp - hid)).reshape(1, hp)

    # Decide (per generation) whether the hidden weight stays VMEM-resident or
    # must be streamed over K tiles.
    budget, _, _ = _vmem_plan()
    wbytes = jnp.dtype(compute_dtype).itemsize
    gating_bytes = _resident_gating_bytes(op, hp, wbytes)
    wh_bytes = 2 * in_dim * op * wbytes      # conservative 2x (see module comment)
    min_tb = _LANE

    k_tile = None
    if gating_bytes + wh_bytes + min_tb * _row_bytes_resident(in_dim, op, hp) > budget:
        for cand in (512, 256, 128):
            need = (gating_bytes + 2 * cand * op * wbytes
                    + min_tb * _row_bytes_ktiled(cand, op, hp))
            if need <= budget:
                k_tile = cand
                break
        else:
            # TODO(synk): add output-channel tiling for gating weights that do
            # not fit VMEM even with K-streaming of the hidden weight.
            raise NotImplementedError(
                "SE-head gating weights too large for VMEM-resident execution")
        kp = _round_up(in_dim, k_tile)
        wh = jnp.pad(wh, ((0, kp - in_dim), (0, 0)))   # zero K padding

    return {"wh": wh, "b1": b1, "wg1": wg1, "b2": b2, "wg2": wg2,
            "in_dim": in_dim, "out_dim": out_dim, "k_tile": k_tile}


# --------------------------------------------------------------------------- #
# Forward
# --------------------------------------------------------------------------- #
def se_head_forward(params, x):
    """Fused SingleSEHead forward (eval mode). x: (batch, in_dim)."""
    assert x.ndim == 2 and x.shape[1] == params["in_dim"], \
        f'Input shape: {x.shape}, Param shape: {params["in_dim"]}'
    return _se_head_pallas(x, params["wh"], params["b1"], params["wg1"],
                           params["b2"], params["wg2"],
                           out_dim=params["out_dim"], k_tile=params["k_tile"])


@functools.partial(jax.jit, static_argnames=("out_dim", "k_tile"))
def _se_head_pallas(x, wh, b1, wg1, b2, wg2, *, out_dim, k_tile):
    B, in_dim = x.shape
    op = wh.shape[1]
    hp = wg1.shape[1]
    out_dtype = x.dtype
    wbytes = jnp.dtype(wh.dtype).itemsize

    budget, vmem_limit, tb_cap = _vmem_plan()
    gating_bytes = _resident_gating_bytes(op, hp, wbytes)
    if k_tile is None:
        resident = gating_bytes + 2 * in_dim * op * wbytes
        per_row = _row_bytes_resident(in_dim, op, hp)
    else:
        resident = gating_bytes + 2 * k_tile * op * wbytes
        per_row = _row_bytes_ktiled(k_tile, op, hp)

    # Batch tile: as large as the budget allows, multiple of 128 rows.
    tb = (budget - resident) // max(per_row, 1)
    tb = min(tb, tb_cap, _round_up(B, _LANE))
    tb = max(_LANE, (tb // _LANE) * _LANE)
    nb = pl.cdiv(B, tb)
    rows = nb * tb

    # Never-re-indexed operands: whole-array VMEM placement (one resident copy).
    vmem_full = pl.BlockSpec(memory_space=pltpu.MemorySpace.VMEM)

    if k_tile is None:
        grid = (nb,)
        kernel = _se_head_kernel_resident
        in_specs = [
            pl.BlockSpec((tb, in_dim), lambda i: (i, 0)),        # x batch tile
            vmem_full, vmem_full, vmem_full, vmem_full, vmem_full,
        ]
        out_spec = pl.BlockSpec((tb, op), lambda i: (i, 0))
        scratch = []
        dims = ("parallel",)
        k_work = in_dim
    else:
        nk = wh.shape[0] // k_tile
        grid = (nb, nk)
        kernel = functools.partial(_se_head_kernel_ktiled,
                                   in_dim=in_dim, k_tile=k_tile)
        in_specs = [
            pl.BlockSpec((tb, k_tile), lambda i, k: (i, k)),     # x (B, K) tile
            pl.BlockSpec((k_tile, op), lambda i, k: (k, 0)),     # wh K tile
            vmem_full, vmem_full, vmem_full, vmem_full,
        ]
        out_spec = pl.BlockSpec((tb, op), lambda i, k: (i, 0))
        scratch = [pltpu.VMEM((tb, op), jnp.float32)]
        dims = ("parallel", "arbitrary")
        k_work = wh.shape[0]

    cost = pl.CostEstimate(
        flops=2 * rows * (k_work * op + op * hp + hp * op),
        transcendentals=rows * op,
        bytes_accessed=int(rows * in_dim * x.dtype.itemsize
                           + (k_work * op + op * hp + hp * op) * wbytes
                           + (op + hp) * 4
                           + rows * op * jnp.dtype(out_dtype).itemsize),
    )

    out = pl.pallas_call(
        kernel,
        out_shape=jax.ShapeDtypeStruct((B, op), out_dtype),
        grid=grid,
        in_specs=in_specs,
        out_specs=out_spec,
        scratch_shapes=scratch,
        compiler_params=pltpu.CompilerParams(
            dimension_semantics=dims,
            vmem_limit_bytes=vmem_limit,
        ),
        cost_estimate=cost,
    )(x, wh, b1, wg1, b2, wg2)

    return out if op == out_dim else out[:, :out_dim]


# --------------------------------------------------------------------------- #
# Reference + test
# --------------------------------------------------------------------------- #
def _kaiming_uniform(key, fan_in, fan_out):
    # torch.nn.init.kaiming_uniform_(mode='fan_in', a=0) -> bound = sqrt(6/fan_in)
    bound = (6.0 / fan_in) ** 0.5
    return jax.random.uniform(key, (fan_in, fan_out), jnp.float32, -bound, bound)


def _reference_forward(x, hidden_w, gate_w1, gate_w2,
                       bn1_gamma, bn1_beta, bn1_mean, bn1_var,
                       bn2_gamma, bn2_beta, bn2_mean, bn2_var,
                       eps, compute_dtype=jnp.float32):
    s1 = bn1_gamma / jnp.sqrt(bn1_var + eps)
    s2 = bn2_gamma / jnp.sqrt(bn2_var + eps)
    b1 = bn1_beta - bn1_mean * s1
    b2 = bn2_beta - bn2_mean * s2
    cd = compute_dtype
    wh = (hidden_w * s1[None, :]).astype(cd)
    w1 = (gate_w1 * s2[None, :]).astype(cd)
    w2 = gate_w2.astype(cd)
    act = jnp.dot(x.astype(cd), wh, preferred_element_type=jnp.float32) + b1[None, :]
    g = jnp.dot(act.astype(cd), w1, preferred_element_type=jnp.float32) + b2[None, :]
    g = jnp.maximum(g, 0.0)
    g = jax.nn.sigmoid(jnp.dot(g.astype(cd), w2, preferred_element_type=jnp.float32))
    return act * g


if __name__ == "__main__":
    # Small shapes consistent with the module: x is (batch, in_dim).
    B, in_dim, out_dim, gating_reduction = 16, 32, 64, 4
    hid = out_dim // gating_reduction
    eps = 1e-5

    keys = jax.random.split(jax.random.PRNGKey(0), 12)
    x = jax.random.normal(keys[0], (B, in_dim), jnp.float32)
    hidden_w = _kaiming_uniform(keys[1], in_dim, out_dim)
    gate_w1 = _kaiming_uniform(keys[2], out_dim, hid)
    gate_w2 = _kaiming_uniform(keys[3], hid, out_dim)

    # Non-trivial eval-mode BN stats to exercise the folding.
    bn1_gamma = 1.0 + 0.1 * jax.random.normal(keys[4], (out_dim,), jnp.float32)
    bn1_beta = 0.1 * jax.random.normal(keys[5], (out_dim,), jnp.float32)
    bn1_mean = 0.1 * jax.random.normal(keys[6], (out_dim,), jnp.float32)
    bn1_var = jax.random.uniform(keys[7], (out_dim,), jnp.float32, 0.5, 1.5)
    bn2_gamma = 1.0 + 0.1 * jax.random.normal(keys[8], (hid,), jnp.float32)
    bn2_beta = 0.1 * jax.random.normal(keys[9], (hid,), jnp.float32)
    bn2_mean = 0.1 * jax.random.normal(keys[10], (hid,), jnp.float32)
    bn2_var = jax.random.uniform(keys[11], (hid,), jnp.float32, 0.5, 1.5)

    # One-time prep (model init), then the lean forward call.
    params = se_head_prepare(hidden_w, gate_w1, gate_w2,
                             bn1_gamma, bn1_beta, bn1_mean, bn1_var,
                             bn2_gamma, bn2_beta, bn2_mean, bn2_var, eps=eps)
    out = jax.block_until_ready(se_head_forward(params, x))
    assert out.shape == (B, out_dim)

    # Loose check vs pure-f32 reference (accounts for bf16 MXU operands).
    ref_f32 = _reference_forward(x, hidden_w, gate_w1, gate_w2,
                                 bn1_gamma, bn1_beta, bn1_mean, bn1_var,
                                 bn2_gamma, bn2_beta, bn2_mean, bn2_var,
                                 eps, compute_dtype=jnp.float32)
    assert jnp.allclose(out, ref_f32, atol=5e-2, rtol=5e-2), \
        float(jnp.max(jnp.abs(out - ref_f32)))

    # Tight check vs a reference using the same bf16 operands / f32 accumulation.
    ref_bf = _reference_forward(x, hidden_w, gate_w1, gate_w2,
                                bn1_gamma, bn1_beta, bn1_mean, bn1_var,
                                bn2_gamma, bn2_beta, bn2_mean, bn2_var,
                                eps, compute_dtype=_COMPUTE_DTYPE)
    assert jnp.allclose(out, ref_bf, atol=5e-3, rtol=5e-3), \
        float(jnp.max(jnp.abs(out - ref_bf)))

    print("KERNEL_OK")
</pallas_src>

<mosaic_0001>
module attributes {stable_mosaic.version = 11 : i64} {
  func.func @_se_head_kernel_resident(%arg0: i32, %arg1: memref<128x32xf32, #tpu.memory_space<vmem>>, %arg2: memref<32x128xbf16, #tpu.memory_space<vmem>>, %arg3: memref<1x128xf32, #tpu.memory_space<vmem>>, %arg4: memref<128x128xbf16, #tpu.memory_space<vmem>>, %arg5: memref<1x128xf32, #tpu.memory_space<vmem>>, %arg6: memref<128x128xbf16, #tpu.memory_space<vmem>>, %arg7: memref<128x128xf32, #tpu.memory_space<vmem>>) attributes {dimension_semantics = [#tpu.dimension_semantics<parallel>], iteration_bounds = array<i64: 1>, scalar_prefetch = 0 : i64, scratch_operands = 0 : i64, tpu.core_type = #tpu.core_type<tc>, window_params = [{transform_indices = @transform_0, window_bounds = array<i64: 128, 32>}, {pipeline_mode = #tpu.pipeline_mode<synchronous>, transform_indices = @transform_1, window_bounds = array<i64: 32, 128>}, {pipeline_mode = #tpu.pipeline_mode<synchronous>, transform_indices = @transform_2, window_bounds = array<i64: 1, 128>}, {pipeline_mode = #tpu.pipeline_mode<synchronous>, transform_indices = @transform_3, window_bounds = array<i64: 128, 128>}, {pipeline_mode = #tpu.pipeline_mode<synchronous>, transform_indices = @transform_4, window_bounds = array<i64: 1, 128>}, {pipeline_mode = #tpu.pipeline_mode<synchronous>, transform_indices = @transform_5, window_bounds = array<i64: 128, 128>}, {transform_indices = @transform_6, window_bounds = array<i64: 128, 128>}]} {
    %c0 = arith.constant 0 : index
    %c0_0 = arith.constant 0 : index
    %0 = vector.load %arg1[%c0, %c0_0] : memref<128x32xf32, #tpu.memory_space<vmem>>, vector<128x32xf32>
    %1 = arith.truncf %0 : vector<128x32xf32> to vector<128x32xbf16>
    %c0_1 = arith.constant 0 : index
    %c0_2 = arith.constant 0 : index
    %2 = vector.load %arg2[%c0_1, %c0_2] : memref<32x128xbf16, #tpu.memory_space<vmem>>, vector<32x128xbf16>
    %cst = arith.constant dense<0.000000e+00> : vector<128x128xf32>
    %3 = tpu.matmul %1, %2, %cst {dimension_numbers = #tpu.dot_dimension_numbers<[1], [0], [0], [1], [0, 0, 1, 1], [], []>} : vector<128x32xbf16>, vector<32x128xbf16>, vector<128x128xf32> -> vector<128x128xf32>
    %c0_3 = arith.constant 0 : index
    %c0_4 = arith.constant 0 : index
    %4 = vector.load %arg3[%c0_3, %c0_4] : memref<1x128xf32, #tpu.memory_space<vmem>>, vector<1x128xf32>
    %5 = vector.broadcast %4 : vector<1x128xf32> to vector<128x128xf32>
    %6 = arith.addf %3, %5 : vector<128x128xf32>
    %7 = arith.truncf %6 : vector<128x128xf32> to vector<128x128xbf16>
    %c0_5 = arith.constant 0 : index
    %c0_6 = arith.constant 0 : index
    %8 = vector.load %arg4[%c0_5, %c0_6] : memref<128x128xbf16, #tpu.memory_space<vmem>>, vector<128x128xbf16>
    %cst_7 = arith.constant dense<0.000000e+00> : vector<128x128xf32>
    %9 = tpu.matmul %7, %8, %cst_7 {dimension_numbers = #tpu.dot_dimension_numbers<[1], [0], [0], [1], [0, 0, 1, 1], [], []>} : vector<128x128xbf16>, vector<128x128xbf16>, vector<128x128xf32> -> vector<128x128xf32>
    %c0_8 = arith.constant 0 : index
    %c0_9 = arith.constant 0 : index
    %10 = vector.load %arg5[%c0_8, %c0_9] : memref<1x128xf32, #tpu.memory_space<vmem>>, vector<1x128xf32>
    %11 = vector.broadcast %10 : vector<1x128xf32> to vector<128x128xf32>
    %12 = arith.addf %9, %11 : vector<128x128xf32>
    %cst_10 = arith.constant 0.000000e+00 : f32
    %13 = vector.broadcast %cst_10 : f32 to vector<128x128xf32>
    %14 = arith.maximumf %12, %13 : vector<128x128xf32>
    %15 = arith.truncf %14 : vector<128x128xf32> to vector<128x128xbf16>
    %c0_11 = arith.constant 0 : index
    %c0_12 = arith.constant 0 : index
    %16 = vector.load %arg6[%c0_11, %c0_12] : memref<128x128xbf16, #tpu.memory_space<vmem>>, vector<128x128xbf16>
    %cst_13 = arith.constant dense<0.000000e+00> : vector<128x128xf32>
    %17 = tpu.matmul %15, %16, %cst_13 {dimension_numbers = #tpu.dot_dimension_numbers<[1], [0], [0], [1], [0, 0, 1, 1], [], []>} : vector<128x128xbf16>, vector<128x128xbf16>, vector<128x128xf32> -> vector<128x128xf32>
    %18 = arith.negf %17 : vector<128x128xf32>
    %19 = math.exp %18 : vector<128x128xf32>
    %cst_14 = arith.constant 1.000000e+00 : f32
    %20 = vector.broadcast %cst_14 : f32 to vector<128x128xf32>
    %21 = arith.addf %20, %19 : vector<128x128xf32>
    %22 = arith.divf %20, %21 : vector<128x128xf32>
    %23 = arith.mulf %6, %22 : vector<128x128xf32>
    %c0_15 = arith.constant 0 : index
    %c0_16 = arith.constant 0 : index
    %24 = vector.load %arg7[%c0_15, %c0_16] : memref<128x128xf32, #tpu.memory_space<vmem>>, vector<128x128xf32>
    tpu.vector_store %arg7[%c0_15, %c0_16], %23 {strides = array<i32>} : memref<128x128xf32, #tpu.memory_space<vmem>>, vector<128x128xf32>,
    return
  }
  func.func @transform_0(%arg0: i32) -> (i32, i32) {
    %c0_i32 = arith.constant 0 : i32
    %c0_i32_0 = arith.constant 0 : i32
    return %arg0, %c0_i32 : i32, i32
  }
  func.func @transform_1(%arg0: i32) -> (i32, i32) {
    %c0_i32 = arith.constant 0 : i32
    %c0_i32_0 = arith.constant 0 : i32
    %c0_i32_1 = arith.constant 0 : i32
    return %c0_i32, %c0_i32_0 : i32, i32
  }
  func.func @transform_2(%arg0: i32) -> (i32, i32) {
    %c0_i32 = arith.constant 0 : i32
    %c0_i32_0 = arith.constant 0 : i32
    %c0_i32_1 = arith.constant 0 : i32
    return %c0_i32, %c0_i32_0 : i32, i32
  }
  func.func @transform_3(%arg0: i32) -> (i32, i32) {
    %c0_i32 = arith.constant 0 : i32
    %c0_i32_0 = arith.constant 0 : i32
    %c0_i32_1 = arith.constant 0 : i32
    return %c0_i32, %c0_i32_0 : i32, i32
  }
  func.func @transform_4(%arg0: i32) -> (i32, i32) {
    %c0_i32 = arith.constant 0 : i32
    %c0_i32_0 = arith.constant 0 : i32
    %c0_i32_1 = arith.constant 0 : i32
    return %c0_i32, %c0_i32_0 : i32, i32
  }
  func.func @transform_5(%arg0: i32) -> (i32, i32) {
    %c0_i32 = arith.constant 0 : i32
    %c0_i32_0 = arith.constant 0 : i32
    %c0_i32_1 = arith.constant 0 : i32
    return %c0_i32, %c0_i32_0 : i32, i32
  }
  func.func @transform_6(%arg0: i32) -> (i32, i32) {
    %c0_i32 = arith.constant 0 : i32
    %c0_i32_0 = arith.constant 0 : i32
    return %arg0, %c0_i32 : i32, i32
  }
}

</mosaic_0001>

<llo_original>
// kernel: _se_head_pallas.1
$region0: #{_se_head_pallas.1}
  #allocation0 [shape = 'u32[]', space=smem, size = 0x4, offset = 0x4, fixed_abs, tag = 'smem constant byte address 0x4 - core index']
  #allocation1 [shape = 'u32[144,128]{1,0:T(1,128)}', space=vmem, size = 0x12000, scoped, tag = 'internal scratch']
  %s0 = inlined_call_operand.hbm [shape: f32[16,32], index: 0, kind: input, shape index: {}]
  %s1 = inlined_call_operand.hbm [shape: bf16[32,128], index: 1, kind: input, shape index: {}]
  %s2 = inlined_call_operand.vmem [shape: f32[1,128], index: 2, kind: input, shape index: {}]
  %s3 = inlined_call_operand.hbm [shape: bf16[128,128], index: 3, kind: input, shape index: {}]
  %s4 = inlined_call_operand.vmem [shape: f32[1,128], index: 4, kind: input, shape index: {}]
  %s5 = inlined_call_operand.hbm [shape: bf16[128,128], index: 5, kind: input, shape index: {}]
  %s6 = inlined_call_operand.hbm [shape: f32[16,128], index: 6, kind: output, shape index: {}]
  %s7 = sld [smem:[#allocation0]]
  $region50: #{_se_head_pallas.1} parent=0
    _
  %s9 = ssub.s32 1, %s7
  %s10 = scalar_select 0, %s9, %s7
  $region1: #{_se_head_pallas.1} parent=0
    #allocation2 [shape = 'u8[65536]{0}', space=vmem, size = 0x10000, scoped, tag = 'input window, operand 0, single buffered']
    #allocation3 [shape = 's32[1]{0}', space=sflag, size = 0x4, scoped, tag = 'scoped memory for _se_head_pallas.1']
    #allocation4 [shape = 's32[1]{0}', space=sflag, size = 0x4, scoped, tag = 'scoped memory for _se_head_pallas.1']
    #allocation5 [shape = 'u8[8192]{0}', space=vmem, size = 0x2000, scoped, tag = 'input window, operand 1, single buffered']
    #allocation6 [shape = 's32[1]{0}', space=sflag, size = 0x4, scoped, tag = 'scoped memory for _se_head_pallas.1']
    #allocation7 [shape = 'u8[32768]{0}', space=vmem, size = 0x8000, scoped, tag = 'input window, operand 3, single buffered']
    #allocation8 [shape = 'u8[32768]{0}', space=vmem, size = 0x8000, scoped, tag = 'input window, operand 5, single buffered']
    #allocation9 [shape = 's32[1]{0}', space=sflag, size = 0x4, scoped, tag = 'scoped memory for _se_head_pallas.1']
    #allocation10 [shape = 'u8[65536]{0}', space=vmem, size = 0x10000, scoped, tag = 'output window, operand 0, single buffered']
    %11 = vsyncpa [#allocation3], 0
    %12 = vsyncpa [#allocation6], 0
    %13 = vsyncpa [#allocation9], 0
    %14 = vsyncpa [#allocation4], 0
    // Predicated region
    $region2: #{_se_head_pallas.1} parent=1 // pred_check
      _
    $region3: #{_se_head_pallas.1} parent=1 // pred_check_branch
      %16 = sbr.rel (0) target = $region5
    $region4: #{_se_head_pallas.1} parent=1 // pred_region
      %s18 = ssub.s32 2048, 256
      %19 = vsyncadd [#allocation3], %s18
      %s20 = sshll.u32 [#allocation2], 4
      %s21 = int_to_ptr.vmem [resolvable:$true] %s20
      %26 = dma.hbm_to_vmem [thread:$0]  %s0, 256, %s21, [#allocation3], 128, 128, 8
    $region5: #{_se_head_pallas.1} parent=1 // pred_fallthru
      _
    // Predicated region
    $region6: #{_se_head_pallas.1} parent=1 // pred_check
      _
    $region7: #{_se_head_pallas.1} parent=1 // pred_check_branch
      %28 = sbr.rel (0) target = $region9
    $region8: #{_se_head_pallas.1} parent=1 // pred_region
      %s30 = ssub.s32 256, 256
      %31 = vsyncadd [#allocation6], %s30
      %s32 = sshll.u32 [#allocation5], 4
      %s33 = int_to_ptr.vmem [resolvable:$true] %s32
      %38 = dma.hbm_to_vmem [thread:$0]  %s1, 256, %s33, [#allocation6], 64, 64, 4
    $region9: #{_se_head_pallas.1} parent=1 // pred_fallthru
      _
    // Predicated region
    $region10: #{_se_head_pallas.1} parent=1 // pred_check
      _
    $region11: #{_se_head_pallas.1} parent=1 // pred_check_branch
      %40 = sbr.rel (0) target = $region13
    $region12: #{_se_head_pallas.1} parent=1 // pred_region
      _
    $region13: #{_se_head_pallas.1} parent=1 // pred_fallthru
      _
    // Predicated region
    $region14: #{_se_head_pallas.1} parent=1 // pred_check
      _
    $region15: #{_se_head_pallas.1} parent=1 // pred_check_branch
      %42 = sbr.rel (0) target = $region17
    $region16: #{_se_head_pallas.1} parent=1 // pred_region
      %s44 = ssub.s32 1024, 1024
      %45 = vsyncadd [#allocation6], %s44
      %s46 = sshll.u32 [#allocation7], 4
      %s47 = int_to_ptr.vmem [resolvable:$true] %s46
      %52 = dma.hbm_to_vmem [thread:$0]  %s3, 1024, %s47, [#allocation6], 64, 64, 4
    $region17: #{_se_head_pallas.1} parent=1 // pred_fallthru
      _
    // Predicated region
    $region18: #{_se_head_pallas.1} parent=1 // pred_check
      _
    $region19: #{_se_head_pallas.1} parent=1 // pred_check_branch
      %54 = sbr.rel (0) target = $region21
    $region20: #{_se_head_pallas.1} parent=1 // pred_region
      _
    $region21: #{_se_head_pallas.1} parent=1 // pred_fallthru
      _
    // Predicated region
    $region22: #{_se_head_pallas.1} parent=1 // pred_check
      _
    $region23: #{_se_head_pallas.1} parent=1 // pred_check_branch
      %56 = sbr.rel (0) target = $region25
    $region24: #{_se_head_pallas.1} parent=1 // pred_region
      %s58 = ssub.s32 1024, 1024
      %59 = vsyncadd [#allocation9], %s58
      %s60 = sshll.u32 [#allocation8], 4
      %s61 = int_to_ptr.vmem [resolvable:$true] %s60
      %66 = dma.hbm_to_vmem [thread:$0]  %s5, 1024, %s61, [#allocation9], 64, 64, 4
    $region25: #{_se_head_pallas.1} parent=1 // pred_fallthru
      _
    // Predicated region
    $region26: #{_se_head_pallas.1} parent=1 // pred_check
      _
    $region27: #{_se_head_pallas.1} parent=1 // pred_check_branch
      %68 = sbr.rel (0) target = $region29
    $region28: #{_se_head_pallas.1} parent=1 // pred_region
      %69 = dma.done [#allocation3], 2048
    $region29: #{_se_head_pallas.1} parent=1 // pred_fallthru
      _
    // Predicated region
    $region30: #{_se_head_pallas.1} parent=1 // pred_check
      _
    $region31: #{_se_head_pallas.1} parent=1 // pred_check_branch
      %71 = sbr.rel (0) target = $region33
    $region32: #{_se_head_pallas.1} parent=1 // pred_region
      %72 = dma.done [#allocation6], 256
    $region33: #{_se_head_pallas.1} parent=1 // pred_fallthru
      _
    // Predicated region
    $region34: #{_se_head_pallas.1} parent=1 // pred_check
      _
    $region35: #{_se_head_pallas.1} parent=1 // pred_check_branch
      %74 = sbr.rel (0) target = $region37
    $region36: #{_se_head_pallas.1} parent=1 // pred_region
      %75 = dma.done [#allocation6], 1024
    $region37: #{_se_head_pallas.1} parent=1 // pred_fallthru
      _
    // Predicated region
    $region38: #{_se_head_pallas.1} parent=1 // pred_check
      _
    $region39: #{_se_head_pallas.1} parent=1 // pred_check_branch
      %77 = sbr.rel (0) target = $region41
    $region40: #{_se_head_pallas.1} parent=1 // pred_region
      %78 = dma.done [#allocation9], 1024
    $region41: #{_se_head_pallas.1} parent=1 // pred_fallthru
      _
    %v80 = vld [vmem:[#allocation2] sm:$0xff]
    %v81 = vld [vmem:[#allocation2 + $0x8] sm:$0xff]
    %v82 = vld [vmem:[#allocation2 + $0x10] sm:$0xff]
    %v83 = vld [vmem:[#allocation2 + $0x18] sm:$0xff]
    %v84 = vld [vmem:[#allocation2 + $0x20] sm:$0xff]
    %v85 = vld [vmem:[#allocation2 + $0x28] sm:$0xff]
    %v86 = vld [vmem:[#allocation2 + $0x30] sm:$0xff]
    %v87 = vld [vmem:[#allocation2 + $0x38] sm:$0xff]
    %v88 = vld [vmem:[#allocation2 + $0x40] sm:$0xff]
    %v89 = vld [vmem:[#allocation2 + $0x48] sm:$0xff]
    %v90 = vld [vmem:[#allocation2 + $0x50] sm:$0xff]
    %v91 = vld [vmem:[#allocation2 + $0x58] sm:$0xff]
    %v92 = vld [vmem:[#allocation2 + $0x60] sm:$0xff]
    %v93 = vld [vmem:[#allocation2 + $0x68] sm:$0xff]
    %v94 = vld [vmem:[#allocation2 + $0x70] sm:$0xff]
    %v95 = vld [vmem:[#allocation2 + $0x78] sm:$0xff]
    %v96 = vpack.c.bf16 %v81, %v80
    %v97 = vpack.c.bf16 %v83, %v82
    %v98 = vpack.c.bf16 %v85, %v84
    %v99 = vpack.c.bf16 %v87, %v86
    %v100 = vpack.c.bf16 %v89, %v88
    %v101 = vpack.c.bf16 %v91, %v90
    %v102 = vpack.c.bf16 %v93, %v92
    %v103 = vpack.c.bf16 %v95, %v94
    %v104 = vld [vmem:[#allocation5] sm:$0xf]
    %v105 = vld [vmem:[#allocation5 + $0x4] sm:$0xf]
    %v106 = vld [vmem:[#allocation5 + $0x8] sm:$0xf]
    %v107 = vld [vmem:[#allocation5 + $0xc] sm:$0xf]
    %v108 = vld [vmem:[%s2] sm:$0x1]
    %v110 = vlaneseq
    %v111 = vshrl.u32 %v110, 7
    %v112 = vsub.s32 0, %v111
    %v113 = vrot.slane %v108, %v112
    %v119 = vunpack.c.l.b16 %v104
    %v120 = vunpack.c.l.b16 %v105
    %v121 = vunpack.c.l.b16 %v106
    %v122 = vunpack.c.l.b16 %v107
    %v123 = vpack.c.b16 %v120, %v119
    %v124 = vpack.c.b16 %v122, %v121
    %vm127 = vcmask 261120
    %v129 = vsel %vm127, %v96, 0
    %v132 = vsel %vm127, %v97, 0
    %v135 = vsel %vm127, %v98, 0
    %v138 = vsel %vm127, %v99, 0
    %v141 = vsel %vm127, %v100, 0
    %v144 = vsel %vm127, %v101, 0
    %v147 = vsel %vm127, %v102, 0
    %v150 = vsel %vm127, %v103, 0
    %152 = vmatprep.subr.bf16.mxu0 0
    %153 = vmatpush1.bf16.msra.mxu0 %v123
    %154 = vmatprep.subr.bf16.mxu0 0
    %155 = vmatpush1.bf16.msra.mxu0 %v124
    %156 = vmatprep.subr.bf16.mxu0 0
    %157 = vmatpush1.bf16.msra.mxu0 0
    %158 = vmatprep.subr.bf16.mxu0 0
    %159 = vmatpush1.bf16.msra.mxu0 0
    %160 = vmatprep.subr.bf16.mxu0 0
    %161 = vmatpush1.bf16.msra.mxu0 0
    %162 = vmatprep.subr.bf16.mxu0 0
    %163 = vmatpush1.bf16.msra.mxu0 0
    %164 = vmatprep.subr.bf16.mxu0 0
    %165 = vmatpush1.bf16.msra.mxu0 0
    %166 = vmatprep.subr.bf16.mxu0 0
    %167 = vmatpush1.bf16.msra.mxu0 0
    %168 = vmatprep.subr.bf16.mxu0 0
    %169 = vmatpush1.bf16.msra.mxu0 0
    %170 = vmatprep.subr.bf16.mxu0 0
    %171 = vmatpush1.bf16.msra.mxu0 0
    %172 = vmatprep.subr.bf16.mxu0 0
    %173 = vmatpush1.bf16.msra.mxu0 0
    %174 = vmatprep.subr.bf16.mxu0 0
    %175 = vmatpush1.bf16.msra.mxu0 0
    %176 = vmatprep.subr.bf16.mxu0 0
    %177 = vmatpush1.bf16.msra.mxu0 0
    %178 = vmatprep.subr.bf16.mxu0 0
    %179 = vmatpush1.bf16.msra.mxu0 0
    %180 = vmatprep.subr.bf16.mxu0 0
    %181 = vmatpush1.bf16.msra.mxu0 0
    %182 = vmatprep.subr.bf16.mxu0 0
    %183 = vmatpush1.bf16.msra.mxu0 0
    %184 = vmatprep.mubr.bf16.mxu0 0
    %185 = vmatmul.mubr.bf16.gmra.mrb[0].mxu0 %v129
    %v186 = vpop.f32.mrb[0].mxu0
    %v187 = vadd.f32 %v113, %v186
    %v188 = vpop.f32.mrb[0].mxu0
    %v189 = vpop.f32.mrb[0].mxu0
    %v190 = vadd.f32 %v113, %v189
    %v191 = vpop.f32.mrb[0].mxu0
    %192 = vmatprep.mubr.bf16.mxu0 0
    %193 = vmatmul.mubr.bf16.gmra.mrb[0].mxu0 %v132
    %v194 = vpop.f32.mrb[0].mxu0
    %v195 = vadd.f32 %v113, %v194
    %v196 = vpop.f32.mrb[0].mxu0
    %v197 = vpop.f32.mrb[0].mxu0
    %v198 = vadd.f32 %v113, %v197
    %v199 = vpop.f32.mrb[0].mxu0
    %200 = vmatprep.mubr.bf16.mxu0 0
    %201 = vmatmul.mubr.bf16.gmra.mrb[0].mxu0 %v135
    %v202 = vpop.f32.mrb[0].mxu0
    %v203 = vadd.f32 %v113, %v202
    %v204 = vpop.f32.mrb[0].mxu0
    %v205 = vpop.f32.mrb[0].mxu0
    %v206 = vadd.f32 %v113, %v205
    %v207 = vpop.f32.mrb[0].mxu0
    %208 = vmatprep.mubr.bf16.mxu0 0
    %209 = vmatmul.mubr.bf16.gmra.mrb[0].mxu0 %v138
    %v210 = vpop.f32.mrb[0].mxu0
    %v211 = vadd.f32 %v113, %v210
    %v212 = vpop.f32.mrb[0].mxu0
    %v213 = vpop.f32.mrb[0].mxu0
    %v214 = vadd.f32 %v113, %v213
    %v215 = vpop.f32.mrb[0].mxu0
    %216 = vmatprep.mubr.bf16.mxu0 0
    %217 = vmatmul.mubr.bf16.gmra.mrb[0].mxu0 %v141
    %v218 = vpop.f32.mrb[0].mxu0
    %v219 = vadd.f32 %v113, %v218
    %v220 = vpop.f32.mrb[0].mxu0
    %v221 = vpop.f32.mrb[0].mxu0
    %v222 = vadd.f32 %v113, %v221
    %v223 = vpop.f32.mrb[0].mxu0
    %224 = vmatprep.mubr.bf16.mxu0 0
    %225 = vmatmul.mubr.bf16.gmra.mrb[0].mxu0 %v144
    %v226 = vpop.f32.mrb[0].mxu0
    %v227 = vadd.f32 %v113, %v226
    %v228 = vpop.f32.mrb[0].mxu0
    %v229 = vpop.f32.mrb[0].mxu0
    %v230 = vadd.f32 %v113, %v229
    %v231 = vpop.f32.mrb[0].mxu0
    %232 = vmatprep.mubr.bf16.mxu0 0
    %233 = vmatmul.mubr.bf16.gmra.mrb[0].mxu0 %v147
    %v234 = vpop.f32.mrb[0].mxu0
    %v235 = vadd.f32 %v113, %v234
    %v236 = vpop.f32.mrb[0].mxu0
    %v237 = vpop.f32.mrb[0].mxu0
    %v238 = vadd.f32 %v113, %v237
    %v239 = vpop.f32.mrb[0].mxu0
    %240 = vmatprep.mubr.bf16.mxu0 0
    %241 = vmatmul.mubr.bf16.gmra.mrb[0].mxu0 %v150
    %v242 = vpop.f32.mrb[0].mxu0
    %v243 = vadd.f32 %v113, %v242
    %v244 = vpop.f32.mrb[0].mxu0
    %v245 = vpop.f32.mrb[0].mxu0
    %v246 = vadd.f32 %v113, %v245
    %v247 = vpop.f32.mrb[0].mxu0
    %248 = vdwg.mxu0
    %v249 = vpack.c.bf16 %v190, %v187
    %v250 = vpack.c.bf16 %v198, %v195
    %v251 = vpack.c.bf16 %v206, %v203
    %v252 = vpack.c.bf16 %v214, %v211
    %v253 = vpack.c.bf16 %v222, %v219
    %v254 = vpack.c.bf16 %v230, %v227
    %v255 = vpack.c.bf16 %v238, %v235
    %v256 = vpack.c.bf16 %v246, %v243
    %v257 = vld [vmem:[#allocation7] sm:$0xf]
    %v258 = vld [vmem:[#allocation7 + $0x4] sm:$0xf]
    %v259 = vld [vmem:[#allocation7 + $0x8] sm:$0xf]
    %v260 = vld [vmem:[#allocation7 + $0xc] sm:$0xf]
    %v261 = vld [vmem:[#allocation7 + $0x10] sm:$0xf]
    %v262 = vld [vmem:[#allocation7 + $0x14] sm:$0xf]
    %v263 = vld [vmem:[#allocation7 + $0x18] sm:$0xf]
    %v264 = vld [vmem:[#allocation7 + $0x1c] sm:$0xf]
    %v265 = vld [vmem:[#allocation7 + $0x20] sm:$0xf]
    %v266 = vld [vmem:[#allocation7 + $0x24] sm:$0xf]
    %v267 = vld [vmem:[#allocation7 + $0x28] sm:$0xf]
    %v268 = vld [vmem:[#allocation7 + $0x2c] sm:$0xf]
    %v269 = vld [vmem:[#allocation7 + $0x30] sm:$0xf]
    %v270 = vld [vmem:[#allocation7 + $0x34] sm:$0xf]
    %v271 = vld [vmem:[#allocation7 + $0x38] sm:$0xf]
    %v272 = vld [vmem:[#allocation7 + $0x3c] sm:$0xf]
    %v273 = vld [vmem:[%s4] sm:$0x1]
    %v275 = vlaneseq
    %v276 = vshrl.u32 %v275, 7
    %v277 = vsub.s32 0, %v276
    %v278 = vrot.slane %v273, %v277
    %v296 = vunpack.c.l.b16 %v257
    %v297 = vunpack.c.l.b16 %v258
    %v298 = vunpack.c.l.b16 %v259
    %v299 = vunpack.c.l.b16 %v260
    %v300 = vunpack.c.l.b16 %v261
    %v301 = vunpack.c.l.b16 %v262
    %v302 = vunpack.c.l.b16 %v263
    %v303 = vunpack.c.l.b16 %v264
    %v304 = vunpack.c.l.b16 %v265
    %v305 = vunpack.c.l.b16 %v266
    %v306 = vunpack.c.l.b16 %v267
    %v307 = vunpack.c.l.b16 %v268
    %v308 = vunpack.c.l.b16 %v269
    %v309 = vunpack.c.l.b16 %v270
    %v310 = vunpack.c.l.b16 %v271
    %v311 = vunpack.c.l.b16 %v272
    %v312 = vpack.c.b16 %v297, %v296
    %v313 = vpack.c.b16 %v299, %v298
    %v314 = vpack.c.b16 %v301, %v300
    %v315 = vpack.c.b16 %v303, %v302
    %v316 = vpack.c.b16 %v305, %v304
    %v317 = vpack.c.b16 %v307, %v306
    %v318 = vpack.c.b16 %v309, %v308
    %v319 = vpack.c.b16 %v311, %v310
    %328 = vmatprep.subr.bf16.mxu0 0
    %329 = vmatpush1.bf16.msra.mxu0 %v312
    %330 = vmatprep.subr.bf16.mxu0 0
    %331 = vmatpush1.bf16.msra.mxu0 %v313
    %332 = vmatprep.subr.bf16.mxu0 0
    %333 = vmatpush1.bf16.msra.mxu0 %v314
    %334 = vmatprep.subr.bf16.mxu0 0
    %335 = vmatpush1.bf16.msra.mxu0 %v315
    %336 = vmatprep.subr.bf16.mxu0 0
    %337 = vmatpush1.bf16.msra.mxu0 %v316
    %338 = vmatprep.subr.bf16.mxu0 0
    %339 = vmatpush1.bf16.msra.mxu0 %v317
    %340 = vmatprep.subr.bf16.mxu0 0
    %341 = vmatpush1.bf16.msra.mxu0 %v318
    %342 = vmatprep.subr.bf16.mxu0 0
    %343 = vmatpush1.bf16.msra.mxu0 %v319
    %344 = vmatprep.subr.bf16.mxu0 0
    %345 = vmatpush1.bf16.msra.mxu0 0
    %346 = vmatprep.subr.bf16.mxu0 0
    %347 = vmatpush1.bf16.msra.mxu0 0
    %348 = vmatprep.subr.bf16.mxu0 0
    %349 = vmatpush1.bf16.msra.mxu0 0
    %350 = vmatprep.subr.bf16.mxu0 0
    %351 = vmatpush1.bf16.msra.mxu0 0
    %352 = vmatprep.subr.bf16.mxu0 0
    %353 = vmatpush1.bf16.msra.mxu0 0
    %354 = vmatprep.subr.bf16.mxu0 0
    %355 = vmatpush1.bf16.msra.mxu0 0
    %356 = vmatprep.subr.bf16.mxu0 0
    %357 = vmatpush1.bf16.msra.mxu0 0
    %358 = vmatprep.subr.bf16.mxu0 0
    %359 = vmatpush1.bf16.msra.mxu0 0
    %360 = vmatprep.mubr.bf16.mxu0 0
    %361 = vmatmul.mubr.bf16.gmra.mrb[0].mxu0 %v249
    %v362 = vpop.f32.mrb[0].mxu0
    %v363 = vadd.f32 %v278, %v362
    %v364 = vpop.f32.mrb[0].mxu0
    %v365 = vpop.f32.mrb[0].mxu0
    %v366 = vadd.f32 %v278, %v365
    %v367 = vpop.f32.mrb[0].mxu0
    %368 = vmatprep.mubr.bf16.mxu0 0
    %369 = vmatmul.mubr.bf16.gmra.mrb[0].mxu0 %v250
    %v370 = vpop.f32.mrb[0].mxu0
    %v371 = vadd.f32 %v278, %v370
    %v372 = vpop.f32.mrb[0].mxu0
    %v373 = vpop.f32.mrb[0].mxu0
    %v374 = vadd.f32 %v278, %v373
    %v375 = vpop.f32.mrb[0].mxu0
    %376 = vmatprep.mubr.bf16.mxu0 0
    %377 = vmatmul.mubr.bf16.gmra.mrb[0].mxu0 %v251
    %v378 = vpop.f32.mrb[0].mxu0
    %v379 = vadd.f32 %v278, %v378
    %v380 = vpop.f32.mrb[0].mxu0
    %v381 = vpop.f32.mrb[0].mxu0
    %v382 = vadd.f32 %v278, %v381
    %v383 = vpop.f32.mrb[0].mxu0
    %384 = vmatprep.mubr.bf16.mxu0 0
    %385 = vmatmul.mubr.bf16.gmra.mrb[0].mxu0 %v252
    %v386 = vpop.f32.mrb[0].mxu0
    %v387 = vadd.f32 %v278, %v386
    %v388 = vpop.f32.mrb[0].mxu0
    %v389 = vpop.f32.mrb[0].mxu0
    %v390 = vadd.f32 %v278, %v389
    %v391 = vpop.f32.mrb[0].mxu0
    %392 = vmatprep.mubr.bf16.mxu0 0
    %393 = vmatmul.mubr.bf16.gmra.mrb[0].mxu0 %v253
    %v394 = vpop.f32.mrb[0].mxu0
    %v395 = vadd.f32 %v278, %v394
    %v396 = vpop.f32.mrb[0].mxu0
    %v397 = vpop.f32.mrb[0].mxu0
    %v398 = vadd.f32 %v278, %v397
    %v399 = vpop.f32.mrb[0].mxu0
    %400 = vmatprep.mubr.bf16.mxu0 0
    %401 = vmatmul.mubr.bf16.gmra.mrb[0].mxu0 %v254
    %v402 = vpop.f32.mrb[0].mxu0
    %v403 = vadd.f32 %v278, %v402
    %v404 = vpop.f32.mrb[0].mxu0
    %v405 = vpop.f32.mrb[0].mxu0
    %v406 = vadd.f32 %v278, %v405
    %v407 = vpop.f32.mrb[0].mxu0
    %408 = vmatprep.mubr.bf16.mxu0 0
    %409 = vmatmul.mubr.bf16.gmra.mrb[0].mxu0 %v255
    %v410 = vpop.f32.mrb[0].mxu0
    %v411 = vadd.f32 %v278, %v410
    %v412 = vpop.f32.mrb[0].mxu0
    %v413 = vpop.f32.mrb[0].mxu0
    %v414 = vadd.f32 %v278, %v413
    %v415 = vpop.f32.mrb[0].mxu0
    %416 = vmatprep.mubr.bf16.mxu0 0
    %417 = vmatmul.mubr.bf16.gmra.mrb[0].mxu0 %v256
    %v418 = vpop.f32.mrb[0].mxu0
    %v419 = vadd.f32 %v278, %v418
    %v420 = vpop.f32.mrb[0].mxu0
    %v421 = vpop.f32.mrb[0].mxu0
    %v422 = vadd.f32 %v278, %v421
    %v423 = vpop.f32.mrb[0].mxu0
    %424 = vdwg.mxu0
    %v425 = vmax.f32 %v363, 0.0
    %v426 = vmax.f32 %v366, 0.0
    %v427 = vmax.f32 %v371, 0.0
    %v428 = vmax.f32 %v374, 0.0
    %v429 = vmax.f32 %v379, 0.0
    %v430 = vmax.f32 %v382, 0.0
    %v431 = vmax.f32 %v387, 0.0
    %v432 = vmax.f32 %v390, 0.0
    %v433 = vmax.f32 %v395, 0.0
    %v434 = vmax.f32 %v398, 0.0
    %v435 = vmax.f32 %v403, 0.0
    %v436 = vmax.f32 %v406, 0.0
    %v437 = vmax.f32 %v411, 0.0
    %v438 = vmax.f32 %v414, 0.0
    %v439 = vmax.f32 %v419, 0.0
    %v440 = vmax.f32 %v422, 0.0
    %v441 = vpack.c.bf16 %v426, %v425
    %v442 = vpack.c.bf16 %v428, %v427
    %v443 = vpack.c.bf16 %v430, %v429
    %v444 = vpack.c.bf16 %v432, %v431
    %v445 = vpack.c.bf16 %v434, %v433
    %v446 = vpack.c.bf16 %v436, %v435
    %v447 = vpack.c.bf16 %v438, %v437
    %v448 = vpack.c.bf16 %v440, %v439
    %v449 = vld [vmem:[#allocation8] sm:$0xf]
    %v450 = vld [vmem:[#allocation8 + $0x4] sm:$0xf]
    %v451 = vld [vmem:[#allocation8 + $0x8] sm:$0xf]
    %v452 = vld [vmem:[#allocation8 + $0xc] sm:$0xf]
    %v453 = vld [vmem:[#allocation8 + $0x10] sm:$0xf]
    %v454 = vld [vmem:[#allocation8 + $0x14] sm:$0xf]
    %v455 = vld [vmem:[#allocation8 + $0x18] sm:$0xf]
    %v456 = vld [vmem:[#allocation8 + $0x1c] sm:$0xf]
    %v457 = vld [vmem:[#allocation8 + $0x20] sm:$0xf]
    %v458 = vld [vmem:[#allocation8 + $0x24] sm:$0xf]
    %v459 = vld [vmem:[#allocation8 + $0x28] sm:$0xf]
    %v460 = vld [vmem:[#allocation8 + $0x2c] sm:$0xf]
    %v461 = vld [vmem:[#allocation8 + $0x30] sm:$0xf]
    %v462 = vld [vmem:[#allocation8 + $0x34] sm:$0xf]
    %v463 = vld [vmem:[#allocation8 + $0x38] sm:$0xf]
    %v464 = vld [vmem:[#allocation8 + $0x3c] sm:$0xf]
    %v481 = vunpack.c.l.b16 %v449
    %v482 = vunpack.c.l.b16 %v450
    %v483 = vunpack.c.l.b16 %v451
    %v484 = vunpack.c.l.b16 %v452
    %v485 = vunpack.c.l.b16 %v453
    %v486 = vunpack.c.l.b16 %v454
    %v487 = vunpack.c.l.b16 %v455
    %v488 = vunpack.c.l.b16 %v456
    %v489 = vunpack.c.l.b16 %v457
    %v490 = vunpack.c.l.b16 %v458
    %v491 = vunpack.c.l.b16 %v459
    %v492 = vunpack.c.l.b16 %v460
    %v493 = vunpack.c.l.b16 %v461
    %v494 = vunpack.c.l.b16 %v462
    %v495 = vunpack.c.l.b16 %v463
    %v496 = vunpack.c.l.b16 %v464
    %v497 = vpack.c.b16 %v482, %v481
    %v498 = vpack.c.b16 %v484, %v483
    %v499 = vpack.c.b16 %v486, %v485
    %v500 = vpack.c.b16 %v488, %v487
    %v501 = vpack.c.b16 %v490, %v489
    %v502 = vpack.c.b16 %v492, %v491
    %v503 = vpack.c.b16 %v494, %v493
    %v504 = vpack.c.b16 %v496, %v495
    %513 = vmatprep.subr.bf16.mxu0 0
    %514 = vmatpush1.bf16.msra.mxu0 %v497
    %515 = vmatprep.subr.bf16.mxu0 0
    %516 = vmatpush1.bf16.msra.mxu0 %v498
    %517 = vmatprep.subr.bf16.mxu0 0
    %518 = vmatpush1.bf16.msra.mxu0 %v499
    %519 = vmatprep.subr.bf16.mxu0 0
    %520 = vmatpush1.bf16.msra.mxu0 %v500
    %521 = vmatprep.subr.bf16.mxu0 0
    %522 = vmatpush1.bf16.msra.mxu0 %v501
    %523 = vmatprep.subr.bf16.mxu0 0
    %524 = vmatpush1.bf16.msra.mxu0 %v502
    %525 = vmatprep.subr.bf16.mxu0 0
    %526 = vmatpush1.bf16.msra.mxu0 %v503
    %527 = vmatprep.subr.bf16.mxu0 0
    %528 = vmatpush1.bf16.msra.mxu0 %v504
    %529 = vmatprep.subr.bf16.mxu0 0
    %530 = vmatpush1.bf16.msra.mxu0 0
    %531 = vmatprep.subr.bf16.mxu0 0
    %532 = vmatpush1.bf16.msra.mxu0 0
    %533 = vmatprep.subr.bf16.mxu0 0
    %534 = vmatpush1.bf16.msra.mxu0 0
    %535 = vmatprep.subr.bf16.mxu0 0
    %536 = vmatpush1.bf16.msra.mxu0 0
    %537 = vmatprep.subr.bf16.mxu0 0
    %538 = vmatpush1.bf16.msra.mxu0 0
    %539 = vmatprep.subr.bf16.mxu0 0
    %540 = vmatpush1.bf16.msra.mxu0 0
    %541 = vmatprep.subr.bf16.mxu0 0
    %542 = vmatpush1.bf16.msra.mxu0 0
    %543 = vmatprep.subr.bf16.mxu0 0
    %544 = vmatpush1.bf16.msra.mxu0 0
    %545 = vmatprep.mubr.bf16.mxu0 0
    %546 = vmatmul.mubr.bf16.gmra.mrb[0].mxu0 %v441
    %v547 = vpop.f32.mrb[0].mxu0
    %v548 = vadd.f32 0.0, %v547
    %v549 = vpop.f32.mrb[0].mxu0
    %v550 = vpop.f32.mrb[0].mxu0
    %v551 = vadd.f32 0.0, %v550
    %v552 = vpop.f32.mrb[0].mxu0
    %553 = vmatprep.mubr.bf16.mxu0 0
    %554 = vmatmul.mubr.bf16.gmra.mrb[0].mxu0 %v442
    %v555 = vpop.f32.mrb[0].mxu0
    %v556 = vadd.f32 0.0, %v555
    %v557 = vpop.f32.mrb[0].mxu0
    %v558 = vpop.f32.mrb[0].mxu0
    %v559 = vadd.f32 0.0, %v558
    %v560 = vpop.f32.mrb[0].mxu0
    %561 = vmatprep.mubr.bf16.mxu0 0
    %562 = vmatmul.mubr.bf16.gmra.mrb[0].mxu0 %v443
    %v563 = vpop.f32.mrb[0].mxu0
    %v564 = vadd.f32 0.0, %v563
    %v565 = vpop.f32.mrb[0].mxu0
    %v566 = vpop.f32.mrb[0].mxu0
    %v567 = vadd.f32 0.0, %v566
    %v568 = vpop.f32.mrb[0].mxu0
    %569 = vmatprep.mubr.bf16.mxu0 0
    %570 = vmatmul.mubr.bf16.gmra.mrb[0].mxu0 %v444
    %v571 = vpop.f32.mrb[0].mxu0
    %v572 = vadd.f32 0.0, %v571
    %v573 = vpop.f32.mrb[0].mxu0
    %v574 = vpop.f32.mrb[0].mxu0
    %v575 = vadd.f32 0.0, %v574
    %v576 = vpop.f32.mrb[0].mxu0
    %577 = vmatprep.mubr.bf16.mxu0 0
    %578 = vmatmul.mubr.bf16.gmra.mrb[0].mxu0 %v445
    %v579 = vpop.f32.mrb[0].mxu0
    %v580 = vadd.f32 0.0, %v579
    %v581 = vpop.f32.mrb[0].mxu0
    %v582 = vpop.f32.mrb[0].mxu0
    %v583 = vadd.f32 0.0, %v582
    %v584 = vpop.f32.mrb[0].mxu0
    %585 = vmatprep.mubr.bf16.mxu0 0
    %586 = vmatmul.mubr.bf16.gmra.mrb[0].mxu0 %v446
    %v587 = vpop.f32.mrb[0].mxu0
    %v588 = vadd.f32 0.0, %v587
    %v589 = vpop.f32.mrb[0].mxu0
    %v590 = vpop.f32.mrb[0].mxu0
    %v591 = vadd.f32 0.0, %v590
    %v592 = vpop.f32.mrb[0].mxu0
    %593 = vmatprep.mubr.bf16.mxu0 0
    %594 = vmatmul.mubr.bf16.gmra.mrb[0].mxu0 %v447
    %v595 = vpop.f32.mrb[0].mxu0
    %v596 = vadd.f32 0.0, %v595
    %v597 = vpop.f32.mrb[0].mxu0
    %v598 = vpop.f32.mrb[0].mxu0
    %v599 = vadd.f32 0.0, %v598
    %v600 = vpop.f32.mrb[0].mxu0
    %601 = vmatprep.mubr.bf16.mxu0 0
    %602 = vmatmul.mubr.bf16.gmra.mrb[0].mxu0 %v448
    %v603 = vpop.f32.mrb[0].mxu0
    %v604 = vadd.f32 0.0, %v603
    %v605 = vpop.f32.mrb[0].mxu0
    %v606 = vpop.f32.mrb[0].mxu0
    %v607 = vadd.f32 0.0, %v606
    %v608 = vpop.f32.mrb[0].mxu0
    %609 = vdwg.mxu0
    %v610 = vxor.u32 %v548, 2147483648
    %v611 = vxor.u32 %v551, 2147483648
    %v612 = vxor.u32 %v556, 2147483648
    %v613 = vxor.u32 %v559, 2147483648
    %v614 = vxor.u32 %v564, 2147483648
    %v615 = vxor.u32 %v567, 2147483648
    %v616 = vxor.u32 %v572, 2147483648
    %v617 = vxor.u32 %v575, 2147483648
    %v618 = vxor.u32 %v580, 2147483648
    %v619 = vxor.u32 %v583, 2147483648
    %v620 = vxor.u32 %v588, 2147483648
    %v621 = vxor.u32 %v591, 2147483648
    %v622 = vxor.u32 %v596, 2147483648
    %v623 = vxor.u32 %v599, 2147483648
    %v624 = vxor.u32 %v604, 2147483648
    %v625 = vxor.u32 %v607, 2147483648
    %v626 = vmul.f32 %v610, 1.442695
    %v627 = vpow.pop %v626
    %v628 = vmul.f32 %v611, 1.442695
    %v629 = vpow.pop %v628
    %v630 = vmul.f32 %v612, 1.442695
    %v631 = vpow.pop %v630
    %v632 = vmul.f32 %v613, 1.442695
    %v633 = vpow.pop %v632
    %v634 = vmul.f32 %v614, 1.442695
    %v635 = vpow.pop %v634
    %v636 = vmul.f32 %v615, 1.442695
    %v637 = vpow.pop %v636
    %v638 = vmul.f32 %v616, 1.442695
    %v639 = vpow.pop %v638
    %v640 = vmul.f32 %v617, 1.442695
    %v641 = vpow.pop %v640
    %v642 = vmul.f32 %v618, 1.442695
    %v643 = vpow.pop %v642
    %v644 = vmul.f32 %v619, 1.442695
    %v645 = vpow.pop %v644
    %v646 = vmul.f32 %v620, 1.442695
    %v647 = vpow.pop %v646
    %v648 = vmul.f32 %v621, 1.442695
    %v649 = vpow.pop %v648
    %v650 = vmul.f32 %v622, 1.442695
    %v651 = vpow.pop %v650
    %v652 = vmul.f32 %v623, 1.442695
    %v653 = vpow.pop %v652
    %v654 = vmul.f32 %v624, 1.442695
    %v655 = vpow.pop %v654
    %v656 = vmul.f32 %v625, 1.442695
    %v657 = vpow.pop %v656
    %v658 = vadd.f32 %v627, 1.0
    %v659 = vadd.f32 %v629, 1.0
    %v660 = vadd.f32 %v631, 1.0
    %v661 = vadd.f32 %v633, 1.0
    %v662 = vadd.f32 %v635, 1.0
    %v663 = vadd.f32 %v637, 1.0
    %v664 = vadd.f32 %v639, 1.0
    %v665 = vadd.f32 %v641, 1.0
    %v666 = vadd.f32 %v643, 1.0
    %v667 = vadd.f32 %v645, 1.0
    %v668 = vadd.f32 %v647, 1.0
    %v669 = vadd.f32 %v649, 1.0
    %v670 = vadd.f32 %v651, 1.0
    %v671 = vadd.f32 %v653, 1.0
    %v672 = vadd.f32 %v655, 1.0
    %v673 = vadd.f32 %v657, 1.0
    %v674 = vrcp.pop %v658
    %v675 = vmul.f32 1.0, %v674
    %v676 = vrcp.pop %v659
    %v677 = vmul.f32 1.0, %v676
    %v678 = vrcp.pop %v660
    %v679 = vmul.f32 1.0, %v678
    %v680 = vrcp.pop %v661
    %v681 = vmul.f32 1.0, %v680
    %v682 = vrcp.pop %v662
    %v683 = vmul.f32 1.0, %v682
    %v684 = vrcp.pop %v663
    %v685 = vmul.f32 1.0, %v684
    %v686 = vrcp.pop %v664
    %v687 = vmul.f32 1.0, %v686
    %v688 = vrcp.pop %v665
    %v689 = vmul.f32 1.0, %v688
    %v690 = vrcp.pop %v666
    %v691 = vmul.f32 1.0, %v690
    %v692 = vrcp.pop %v667
    %v693 = vmul.f32 1.0, %v692
    %v694 = vrcp.pop %v668
    %v695 = vmul.f32 1.0, %v694
    %v696 = vrcp.pop %v669
    %v697 = vmul.f32 1.0, %v696
    %v698 = vrcp.pop %v670
    %v699 = vmul.f32 1.0, %v698
    %v700 = vrcp.pop %v671
    %v701 = vmul.f32 1.0, %v700
    %v702 = vrcp.pop %v672
    %v703 = vmul.f32 1.0, %v702
    %v704 = vrcp.pop %v673
    %v705 = vmul.f32 1.0, %v704
    %v706 = vmul.f32 %v187, %v675
    %v707 = vmul.f32 %v190, %v677
    %v708 = vmul.f32 %v195, %v679
    %v709 = vmul.f32 %v198, %v681
    %v710 = vmul.f32 %v203, %v683
    %v711 = vmul.f32 %v206, %v685
    %v712 = vmul.f32 %v211, %v687
    %v713 = vmul.f32 %v214, %v689
    %v714 = vmul.f32 %v219, %v691
    %v715 = vmul.f32 %v222, %v693
    %v716 = vmul.f32 %v227, %v695
    %v717 = vmul.f32 %v230, %v697
    %v718 = vmul.f32 %v235, %v699
    %v719 = vmul.f32 %v238, %v701
    %v720 = vmul.f32 %v243, %v703
    %v721 = vmul.f32 %v246, %v705
    %722 = vst [vmem:[#allocation10] sm:$0xff] %v706
    %723 = vst [vmem:[#allocation10 + $0x8] sm:$0xff] %v707
    %724 = vst [vmem:[#allocation10 + $0x10] sm:$0xff] %v708
    %725 = vst [vmem:[#allocation10 + $0x18] sm:$0xff] %v709
    %726 = vst [vmem:[#allocation10 + $0x20] sm:$0xff] %v710
    %727 = vst [vmem:[#allocation10 + $0x28] sm:$0xff] %v711
    %728 = vst [vmem:[#allocation10 + $0x30] sm:$0xff] %v712
    %729 = vst [vmem:[#allocation10 + $0x38] sm:$0xff] %v713
    %730 = vst [vmem:[#allocation10 + $0x40] sm:$0xff] %v714
    %731 = vst [vmem:[#allocation10 + $0x48] sm:$0xff] %v715
    %732 = vst [vmem:[#allocation10 + $0x50] sm:$0xff] %v716
    %733 = vst [vmem:[#allocation10 + $0x58] sm:$0xff] %v717
    %734 = vst [vmem:[#allocation10 + $0x60] sm:$0xff] %v718
    %735 = vst [vmem:[#allocation10 + $0x68] sm:$0xff] %v719
    %736 = vst [vmem:[#allocation10 + $0x70] sm:$0xff] %v720
    %737 = vst [vmem:[#allocation10 + $0x78] sm:$0xff] %v721
    // Predicated region
    $region42: #{_se_head_pallas.1} parent=1 // pred_check
      _
    $region43: #{_se_head_pallas.1} parent=1 // pred_check_branch
      %739 = sbr.rel (0) target = $region45
    $region44: #{_se_head_pallas.1} parent=1 // pred_region
      %s741 = ssub.s32 2048, 256
      %742 = vsyncadd [#allocation4], %s741
      %s743 = sshll.u32 [#allocation10], 4
      %s744 = int_to_ptr.vmem [resolvable:$true] %s743
      %749 = dma.vmem_to_hbm [thread:$0]  %s744, 256, %s6, [#allocation4], 128, 128, 8
    $region45: #{_se_head_pallas.1} parent=1 // pred_fallthru
      _
    // Predicated region
    $region46: #{_se_head_pallas.1} parent=1 // pred_check
      _
    $region47: #{_se_head_pallas.1} parent=1 // pred_check_branch
      %751 = sbr.rel (0) target = $region49
    $region48: #{_se_head_pallas.1} parent=1 // pred_region
      %752 = dma.done [#allocation4], 2048
    $region49: #{_se_head_pallas.1} parent=1 // pred_fallthru
      _
    %753 = vsyncpa [#allocation3], 1
    %754 = vsyncpa [#allocation6], 1
    %755 = vsyncpa [#allocation9], 1
    %756 = vsyncpa [#allocation4], 1

</llo_original>
